<compile_context>
chip_gen: v7x
topology: tpu7x:2x2x1
jax: 0.10.0
libtpu: 0.0.40
codegen_flags: <defaults>
</compile_context>

<pallas_src>
import jax
import jax.numpy as jnp
from jax import lax
from jax.experimental import pallas as pl
from jax.experimental.pallas import tpu as pltpu

WORDS = 32       # vocabulary size
DEPTH = 32       # embedding / hidden size
NCLS = 3         # output classes
PAD_B = 8        # sublane padding of the batch dimension
OUT_LANES = 128  # lane-dense fc output width (real logits live in cols 0..NCLS-1)


def lstm_fc_kernel(tok_ref, w_x_ref, w_h_ref, b_ref, w_fc_ref, b_fc_ref, out_ref):
    """Fused Embedding -> LSTM -> Linear forward.

    tok:  (T*BP, 1) int32, row r = t*BP + b  ->  token id of (batch b, step t)
    w_x:  (WORDS, 4*D)   bf16 = emb @ W_ih^T   (embedding folded into input proj)
    w_h:  (D, 4*D)       bf16 = W_hh^T
    b:    (1, 4*D)       f32  = b_ih + b_hh
    w_fc: (D, OUT_LANES) bf16 (zero-padded past NCLS), b_fc: (1, OUT_LANES) f32
    out:  (BP, OUT_LANES) f32
    """
    BP = out_ref.shape[0]
    T = tok_ref.shape[0] // BP
    D = DEPTH

    # Hoisted weight loads -- resident across the unrolled recurrence.
    w_x = w_x_ref[...]                                    # (WORDS, 4D) bf16
    w_h = w_h_ref[...]                                    # (D, 4D)     bf16
    b = b_ref[...]                                        # (1, 4D)     f32

    # --- Vectorized one-hot: one broadcast compare + cast (no scalar loop). ---
    lane = lax.broadcasted_iota(jnp.int32, (T * BP, WORDS), 1)
    onehot = (lane == tok_ref[...]).astype(jnp.bfloat16)  # (T*BP, WORDS)

    # --- Input-side gate pre-activations for all timesteps: one MXU matmul. ---
    xg = jnp.dot(onehot, w_x, preferred_element_type=jnp.float32) + b  # (T*BP, 4D) f32

    # --- Recurrence: one fused bf16 (BP, D) @ (D, 4D) matmul per step. ---
    h = jnp.zeros((BP, D), jnp.float32)
    c = jnp.zeros((BP, D), jnp.float32)
    for t in range(T):                                    # static T -> fully unrolled
        gates = xg[t * BP:(t + 1) * BP, :] + jnp.dot(     # aligned (8, 128) slice
            h.astype(jnp.bfloat16), w_h, preferred_element_type=jnp.float32)
        i_f = jax.nn.sigmoid(gates[:, 0:2 * D])           # i|f lanes only
        g_g = jnp.tanh(gates[:, 2 * D:3 * D])             # g lanes only
        o_g = jax.nn.sigmoid(gates[:, 3 * D:4 * D])       # o lanes only
        c = i_f[:, D:2 * D] * c + i_f[:, 0:D] * g_g
        h = o_g * jnp.tanh(c)

    # --- fc on hn[-1]; lane-dense (BP, 128) store. ---
    out_ref[...] = (jnp.dot(h.astype(jnp.bfloat16), w_fc_ref[...],
                            preferred_element_type=jnp.float32) + b_fc_ref[...])


def classifier_forward(tokens, params):
    """tokens: (B, T) int32. Returns (B, NCLS) float32 logits."""
    B, T = tokens.shape
    BP = max(PAD_B, ((B + 7) // 8) * 8)   # sublane-pad the batch dim
    # Trace-time layout plumbing: pad batch with token 0 (padding_idx -> zero row),
    # go time-major, flatten to a (T*BP, 1) int32 column for the in-kernel compare.
    tok_p = jnp.zeros((BP, T), jnp.int32).at[:B].set(tokens.astype(jnp.int32))
    tok_col = tok_p.T.reshape(T * BP, 1)

    out = pl.pallas_call(
        lstm_fc_kernel,
        out_shape=jax.ShapeDtypeStruct((BP, OUT_LANES), jnp.float32),
        in_specs=[
            pl.BlockSpec(memory_space=pltpu.MemorySpace.VMEM),   # token column
            pl.BlockSpec(memory_space=pltpu.MemorySpace.VMEM),   # w_x (emb folded)
            pl.BlockSpec(memory_space=pltpu.MemorySpace.VMEM),   # w_h
            pl.BlockSpec(memory_space=pltpu.MemorySpace.VMEM),   # b
            pl.BlockSpec(memory_space=pltpu.MemorySpace.VMEM),   # w_fc (padded)
            pl.BlockSpec(memory_space=pltpu.MemorySpace.VMEM),   # b_fc (padded)
        ],
        out_specs=pl.BlockSpec(memory_space=pltpu.MemorySpace.VMEM),
    )(tok_col, params["w_x"], params["w_h"], params["b"],
      params["w_fc"], params["b_fc"])
    return out[:B, :NCLS]


def init_params(key):
    """Deterministic synthetic init matching nn.Embedding / nn.LSTM / nn.Linear
    shapes, repacked once (at init, not per call) into the fused kernel layout."""
    D = DEPTH
    k_emb, k_wih, k_whh, k_bih, k_bhh, k_wfc, k_bfc = jax.random.split(key, 7)

    # nn.Embedding(WORDS, DEPTH, padding_idx=0): N(0,1), row 0 zeroed.
    emb = jax.random.normal(k_emb, (WORDS, D), jnp.float32).at[0].set(0.0)

    bound = 1.0 / (D ** 0.5)
    # PyTorch LSTM params (gate order i, f, g, o stacked along the 4*D axis).
    w_ih = jax.random.uniform(k_wih, (4 * D, D), jnp.float32, -bound, bound)
    w_hh = jax.random.uniform(k_whh, (4 * D, D), jnp.float32, -bound, bound)
    b_ih = jax.random.uniform(k_bih, (4 * D,), jnp.float32, -bound, bound)
    b_hh = jax.random.uniform(k_bhh, (4 * D,), jnp.float32, -bound, bound)
    # nn.Linear(DEPTH, 3): weight (3, D), bias (3,).
    w_fc = jax.random.uniform(k_wfc, (NCLS, D), jnp.float32, -bound, bound)
    b_fc = jax.random.uniform(k_bfc, (NCLS,), jnp.float32, -bound, bound)

    # Lane-dense fc layout (zero-padded past NCLS).
    w_fc_pad = jnp.zeros((D, OUT_LANES), jnp.float32).at[:, :NCLS].set(w_fc.T)
    b_fc_pad = jnp.zeros((1, OUT_LANES), jnp.float32).at[0, :NCLS].set(b_fc)

    return dict(
        # fused / bf16 kernel weights
        w_x=(emb @ w_ih.T).astype(jnp.bfloat16),   # (WORDS, 4*D)
        w_h=w_hh.T.astype(jnp.bfloat16),           # (D, 4*D)
        b=(b_ih + b_hh)[None, :],                  # (1, 4*D) f32
        w_fc=w_fc_pad.astype(jnp.bfloat16),        # (D, 128)
        b_fc=b_fc_pad,                             # (1, 128) f32
        # raw f32 params kept for the pure-JAX reference check
        emb=emb, w_ih=w_ih, w_hh=w_hh, b_ih=b_ih, b_hh=b_hh,
        w_fc_raw=w_fc, b_fc_raw=b_fc,
    )


def classifier_reference(tokens, params):
    """Pure-JAX f32 reference with PyTorch LSTM semantics (for tolerance check)."""
    D = DEPTH
    x = params["emb"][tokens]                       # (B, T, D)
    B, T, _ = x.shape
    h = jnp.zeros((B, D), jnp.float32)
    c = jnp.zeros((B, D), jnp.float32)
    for t in range(T):
        g = (x[:, t] @ params["w_ih"].T + params["b_ih"]
             + h @ params["w_hh"].T + params["b_hh"])
        i = jax.nn.sigmoid(g[:, 0:D])
        f = jax.nn.sigmoid(g[:, D:2 * D])
        gg = jnp.tanh(g[:, 2 * D:3 * D])
        o = jax.nn.sigmoid(g[:, 3 * D:4 * D])
        c = f * c + i * gg
        h = o * jnp.tanh(c)
    return h @ params["w_fc_raw"].T + params["b_fc_raw"]


if __name__ == "__main__":
    key = jax.random.PRNGKey(0)
    k_tok, k_param = jax.random.split(key)

    B, T = 2, 8
    tokens = jax.random.randint(k_tok, (B, T), 0, WORDS, dtype=jnp.int32)
    params = init_params(k_param)

    logits = classifier_forward(tokens, params)
    jax.block_until_ready(logits)
    assert logits.shape == (B, NCLS) and logits.dtype == jnp.float32

    # bf16 MXU operands => small drift vs the f32 reference; tolerance check.
    ref = classifier_reference(tokens, params)
    assert jnp.allclose(logits, ref, rtol=5e-2, atol=5e-2), (logits, ref)

    print("KERNEL_OK")
</pallas_src>

<mosaic_0001>
module attributes {stable_mosaic.version = 11 : i64} {
  func.func @lstm_fc_kernel(%arg0: memref<64x1xi32, #tpu.memory_space<vmem>>, %arg1: memref<32x128xbf16, #tpu.memory_space<vmem>>, %arg2: memref<32x128xbf16, #tpu.memory_space<vmem>>, %arg3: memref<1x128xf32, #tpu.memory_space<vmem>>, %arg4: memref<32x128xbf16, #tpu.memory_space<vmem>>, %arg5: memref<1x128xf32, #tpu.memory_space<vmem>>, %arg6: memref<8x128xf32, #tpu.memory_space<vmem>>) attributes {dimension_semantics = [], scalar_prefetch = 0 : i64, scratch_operands = 0 : i64, tpu.core_type = #tpu.core_type<tc>} {
    %c0 = arith.constant 0 : index
    %c0_0 = arith.constant 0 : index
    %0 = vector.load %arg1[%c0, %c0_0] : memref<32x128xbf16, #tpu.memory_space<vmem>>, vector<32x128xbf16>
    %c0_1 = arith.constant 0 : index
    %c0_2 = arith.constant 0 : index
    %1 = vector.load %arg2[%c0_1, %c0_2] : memref<32x128xbf16, #tpu.memory_space<vmem>>, vector<32x128xbf16>
    %c0_3 = arith.constant 0 : index
    %c0_4 = arith.constant 0 : index
    %2 = vector.load %arg3[%c0_3, %c0_4] : memref<1x128xf32, #tpu.memory_space<vmem>>, vector<1x128xf32>
    %3 = tpu.iota {dimensions = array<i32: 1>} : vector<64x32xi32>
    %c0_5 = arith.constant 0 : index
    %c0_6 = arith.constant 0 : index
    %4 = vector.load %arg0[%c0_5, %c0_6] : memref<64x1xi32, #tpu.memory_space<vmem>>, vector<64x1xi32>
    %5 = vector.broadcast %4 : vector<64x1xi32> to vector<64x32xi32>
    %6 = arith.cmpi eq, %3, %5 : vector<64x32xi32>
    %7 = arith.extui %6 : vector<64x32xi1> to vector<64x32xi32>
    %8 = arith.sitofp %7 : vector<64x32xi32> to vector<64x32xf32>
    %9 = arith.truncf %8 : vector<64x32xf32> to vector<64x32xbf16>
    %cst = arith.constant dense<0.000000e+00> : vector<64x128xf32>
    %10 = tpu.matmul %9, %0, %cst {dimension_numbers = #tpu.dot_dimension_numbers<[1], [0], [0], [1], [0, 0, 1, 1], [], []>} : vector<64x32xbf16>, vector<32x128xbf16>, vector<64x128xf32> -> vector<64x128xf32>
    %11 = vector.broadcast %2 : vector<1x128xf32> to vector<64x128xf32>
    %12 = arith.addf %10, %11 : vector<64x128xf32>
    %cst_7 = arith.constant 0.000000e+00 : f32
    %13 = vector.broadcast %cst_7 : f32 to vector<8x32xf32>
    %cst_8 = arith.constant 0.000000e+00 : f32
    %14 = vector.broadcast %cst_8 : f32 to vector<8x32xf32>
    %15 = vector.extract_strided_slice %12 {offsets = [0, 0], sizes = [8, 128], strides = [1, 1]} : vector<64x128xf32> to vector<8x128xf32>
    %16 = arith.truncf %13 : vector<8x32xf32> to vector<8x32xbf16>
    %cst_9 = arith.constant dense<0.000000e+00> : vector<8x128xf32>
    %17 = tpu.matmul %16, %1, %cst_9 {dimension_numbers = #tpu.dot_dimension_numbers<[1], [0], [0], [1], [0, 0, 1, 1], [], []>} : vector<8x32xbf16>, vector<32x128xbf16>, vector<8x128xf32> -> vector<8x128xf32>
    %18 = arith.addf %15, %17 : vector<8x128xf32>
    %19 = vector.extract_strided_slice %18 {offsets = [0, 0], sizes = [8, 64], strides = [1, 1]} : vector<8x128xf32> to vector<8x64xf32>
    %20 = arith.negf %19 : vector<8x64xf32>
    %21 = math.exp %20 : vector<8x64xf32>
    %cst_10 = arith.constant 1.000000e+00 : f32
    %22 = vector.broadcast %cst_10 : f32 to vector<8x64xf32>
    %23 = arith.addf %22, %21 : vector<8x64xf32>
    %24 = arith.divf %22, %23 : vector<8x64xf32>
    %25 = vector.extract_strided_slice %18 {offsets = [0, 64], sizes = [8, 32], strides = [1, 1]} : vector<8x128xf32> to vector<8x32xf32>
    %26 = math.tanh %25 : vector<8x32xf32>
    %27 = vector.extract_strided_slice %18 {offsets = [0, 96], sizes = [8, 32], strides = [1, 1]} : vector<8x128xf32> to vector<8x32xf32>
    %28 = arith.negf %27 : vector<8x32xf32>
    %29 = math.exp %28 : vector<8x32xf32>
    %cst_11 = arith.constant 1.000000e+00 : f32
    %30 = vector.broadcast %cst_11 : f32 to vector<8x32xf32>
    %31 = arith.addf %30, %29 : vector<8x32xf32>
    %32 = arith.divf %30, %31 : vector<8x32xf32>
    %33 = vector.extract_strided_slice %24 {offsets = [0, 32], sizes = [8, 32], strides = [1, 1]} : vector<8x64xf32> to vector<8x32xf32>
    %34 = arith.mulf %33, %14 : vector<8x32xf32>
    %35 = vector.extract_strided_slice %24 {offsets = [0, 0], sizes = [8, 32], strides = [1, 1]} : vector<8x64xf32> to vector<8x32xf32>
    %36 = arith.mulf %35, %26 : vector<8x32xf32>
    %37 = arith.addf %34, %36 : vector<8x32xf32>
    %38 = math.tanh %37 : vector<8x32xf32>
    %39 = arith.mulf %32, %38 : vector<8x32xf32>
    %40 = vector.extract_strided_slice %12 {offsets = [8, 0], sizes = [8, 128], strides = [1, 1]} : vector<64x128xf32> to vector<8x128xf32>
    %41 = arith.truncf %39 : vector<8x32xf32> to vector<8x32xbf16>
    %cst_12 = arith.constant dense<0.000000e+00> : vector<8x128xf32>
    %42 = tpu.matmul %41, %1, %cst_12 {dimension_numbers = #tpu.dot_dimension_numbers<[1], [0], [0], [1], [0, 0, 1, 1], [], []>} : vector<8x32xbf16>, vector<32x128xbf16>, vector<8x128xf32> -> vector<8x128xf32>
    %43 = arith.addf %40, %42 : vector<8x128xf32>
    %44 = vector.extract_strided_slice %43 {offsets = [0, 0], sizes = [8, 64], strides = [1, 1]} : vector<8x128xf32> to vector<8x64xf32>
    %45 = arith.negf %44 : vector<8x64xf32>
    %46 = math.exp %45 : vector<8x64xf32>
    %cst_13 = arith.constant 1.000000e+00 : f32
    %47 = vector.broadcast %cst_13 : f32 to vector<8x64xf32>
    %48 = arith.addf %47, %46 : vector<8x64xf32>
    %49 = arith.divf %47, %48 : vector<8x64xf32>
    %50 = vector.extract_strided_slice %43 {offsets = [0, 64], sizes = [8, 32], strides = [1, 1]} : vector<8x128xf32> to vector<8x32xf32>
    %51 = math.tanh %50 : vector<8x32xf32>
    %52 = vector.extract_strided_slice %43 {offsets = [0, 96], sizes = [8, 32], strides = [1, 1]} : vector<8x128xf32> to vector<8x32xf32>
    %53 = arith.negf %52 : vector<8x32xf32>
    %54 = math.exp %53 : vector<8x32xf32>
    %cst_14 = arith.constant 1.000000e+00 : f32
    %55 = vector.broadcast %cst_14 : f32 to vector<8x32xf32>
    %56 = arith.addf %55, %54 : vector<8x32xf32>
    %57 = arith.divf %55, %56 : vector<8x32xf32>
    %58 = vector.extract_strided_slice %49 {offsets = [0, 32], sizes = [8, 32], strides = [1, 1]} : vector<8x64xf32> to vector<8x32xf32>
    %59 = arith.mulf %58, %37 : vector<8x32xf32>
    %60 = vector.extract_strided_slice %49 {offsets = [0, 0], sizes = [8, 32], strides = [1, 1]} : vector<8x64xf32> to vector<8x32xf32>
    %61 = arith.mulf %60, %51 : vector<8x32xf32>
    %62 = arith.addf %59, %61 : vector<8x32xf32>
    %63 = math.tanh %62 : vector<8x32xf32>
    %64 = arith.mulf %57, %63 : vector<8x32xf32>
    %65 = vector.extract_strided_slice %12 {offsets = [16, 0], sizes = [8, 128], strides = [1, 1]} : vector<64x128xf32> to vector<8x128xf32>
    %66 = arith.truncf %64 : vector<8x32xf32> to vector<8x32xbf16>
    %cst_15 = arith.constant dense<0.000000e+00> : vector<8x128xf32>
    %67 = tpu.matmul %66, %1, %cst_15 {dimension_numbers = #tpu.dot_dimension_numbers<[1], [0], [0], [1], [0, 0, 1, 1], [], []>} : vector<8x32xbf16>, vector<32x128xbf16>, vector<8x128xf32> -> vector<8x128xf32>
    %68 = arith.addf %65, %67 : vector<8x128xf32>
    %69 = vector.extract_strided_slice %68 {offsets = [0, 0], sizes = [8, 64], strides = [1, 1]} : vector<8x128xf32> to vector<8x64xf32>
    %70 = arith.negf %69 : vector<8x64xf32>
    %71 = math.exp %70 : vector<8x64xf32>
    %cst_16 = arith.constant 1.000000e+00 : f32
    %72 = vector.broadcast %cst_16 : f32 to vector<8x64xf32>
    %73 = arith.addf %72, %71 : vector<8x64xf32>
    %74 = arith.divf %72, %73 : vector<8x64xf32>
    %75 = vector.extract_strided_slice %68 {offsets = [0, 64], sizes = [8, 32], strides = [1, 1]} : vector<8x128xf32> to vector<8x32xf32>
    %76 = math.tanh %75 : vector<8x32xf32>
    %77 = vector.extract_strided_slice %68 {offsets = [0, 96], sizes = [8, 32], strides = [1, 1]} : vector<8x128xf32> to vector<8x32xf32>
    %78 = arith.negf %77 : vector<8x32xf32>
    %79 = math.exp %78 : vector<8x32xf32>
    %cst_17 = arith.constant 1.000000e+00 : f32
    %80 = vector.broadcast %cst_17 : f32 to vector<8x32xf32>
    %81 = arith.addf %80, %79 : vector<8x32xf32>
    %82 = arith.divf %80, %81 : vector<8x32xf32>
    %83 = vector.extract_strided_slice %74 {offsets = [0, 32], sizes = [8, 32], strides = [1, 1]} : vector<8x64xf32> to vector<8x32xf32>
    %84 = arith.mulf %83, %62 : vector<8x32xf32>
    %85 = vector.extract_strided_slice %74 {offsets = [0, 0], sizes = [8, 32], strides = [1, 1]} : vector<8x64xf32> to vector<8x32xf32>
    %86 = arith.mulf %85, %76 : vector<8x32xf32>
    %87 = arith.addf %84, %86 : vector<8x32xf32>
    %88 = math.tanh %87 : vector<8x32xf32>
    %89 = arith.mulf %82, %88 : vector<8x32xf32>
    %90 = vector.extract_strided_slice %12 {offsets = [24, 0], sizes = [8, 128], strides = [1, 1]} : vector<64x128xf32> to vector<8x128xf32>
    %91 = arith.truncf %89 : vector<8x32xf32> to vector<8x32xbf16>
    %cst_18 = arith.constant dense<0.000000e+00> : vector<8x128xf32>
    %92 = tpu.matmul %91, %1, %cst_18 {dimension_numbers = #tpu.dot_dimension_numbers<[1], [0], [0], [1], [0, 0, 1, 1], [], []>} : vector<8x32xbf16>, vector<32x128xbf16>, vector<8x128xf32> -> vector<8x128xf32>
    %93 = arith.addf %90, %92 : vector<8x128xf32>
    %94 = vector.extract_strided_slice %93 {offsets = [0, 0], sizes = [8, 64], strides = [1, 1]} : vector<8x128xf32> to vector<8x64xf32>
    %95 = arith.negf %94 : vector<8x64xf32>
    %96 = math.exp %95 : vector<8x64xf32>
    %cst_19 = arith.constant 1.000000e+00 : f32
    %97 = vector.broadcast %cst_19 : f32 to vector<8x64xf32>
    %98 = arith.addf %97, %96 : vector<8x64xf32>
    %99 = arith.divf %97, %98 : vector<8x64xf32>
    %100 = vector.extract_strided_slice %93 {offsets = [0, 64], sizes = [8, 32], strides = [1, 1]} : vector<8x128xf32> to vector<8x32xf32>
    %101 = math.tanh %100 : vector<8x32xf32>
    %102 = vector.extract_strided_slice %93 {offsets = [0, 96], sizes = [8, 32], strides = [1, 1]} : vector<8x128xf32> to vector<8x32xf32>
    %103 = arith.negf %102 : vector<8x32xf32>
    %104 = math.exp %103 : vector<8x32xf32>
    %cst_20 = arith.constant 1.000000e+00 : f32
    %105 = vector.broadcast %cst_20 : f32 to vector<8x32xf32>
    %106 = arith.addf %105, %104 : vector<8x32xf32>
    %107 = arith.divf %105, %106 : vector<8x32xf32>
    %108 = vector.extract_strided_slice %99 {offsets = [0, 32], sizes = [8, 32], strides = [1, 1]} : vector<8x64xf32> to vector<8x32xf32>
    %109 = arith.mulf %108, %87 : vector<8x32xf32>
    %110 = vector.extract_strided_slice %99 {offsets = [0, 0], sizes = [8, 32], strides = [1, 1]} : vector<8x64xf32> to vector<8x32xf32>
    %111 = arith.mulf %110, %101 : vector<8x32xf32>
    %112 = arith.addf %109, %111 : vector<8x32xf32>
    %113 = math.tanh %112 : vector<8x32xf32>
    %114 = arith.mulf %107, %113 : vector<8x32xf32>
    %115 = vector.extract_strided_slice %12 {offsets = [32, 0], sizes = [8, 128], strides = [1, 1]} : vector<64x128xf32> to vector<8x128xf32>
    %116 = arith.truncf %114 : vector<8x32xf32> to vector<8x32xbf16>
    %cst_21 = arith.constant dense<0.000000e+00> : vector<8x128xf32>
    %117 = tpu.matmul %116, %1, %cst_21 {dimension_numbers = #tpu.dot_dimension_numbers<[1], [0], [0], [1], [0, 0, 1, 1], [], []>} : vector<8x32xbf16>, vector<32x128xbf16>, vector<8x128xf32> -> vector<8x128xf32>
    %118 = arith.addf %115, %117 : vector<8x128xf32>
    %119 = vector.extract_strided_slice %118 {offsets = [0, 0], sizes = [8, 64], strides = [1, 1]} : vector<8x128xf32> to vector<8x64xf32>
    %120 = arith.negf %119 : vector<8x64xf32>
    %121 = math.exp %120 : vector<8x64xf32>
    %cst_22 = arith.constant 1.000000e+00 : f32
    %122 = vector.broadcast %cst_22 : f32 to vector<8x64xf32>
    %123 = arith.addf %122, %121 : vector<8x64xf32>
    %124 = arith.divf %122, %123 : vector<8x64xf32>
    %125 = vector.extract_strided_slice %118 {offsets = [0, 64], sizes = [8, 32], strides = [1, 1]} : vector<8x128xf32> to vector<8x32xf32>
    %126 = math.tanh %125 : vector<8x32xf32>
    %127 = vector.extract_strided_slice %118 {offsets = [0, 96], sizes = [8, 32], strides = [1, 1]} : vector<8x128xf32> to vector<8x32xf32>
    %128 = arith.negf %127 : vector<8x32xf32>
    %129 = math.exp %128 : vector<8x32xf32>
    %cst_23 = arith.constant 1.000000e+00 : f32
    %130 = vector.broadcast %cst_23 : f32 to vector<8x32xf32>
    %131 = arith.addf %130, %129 : vector<8x32xf32>
    %132 = arith.divf %130, %131 : vector<8x32xf32>
    %133 = vector.extract_strided_slice %124 {offsets = [0, 32], sizes = [8, 32], strides = [1, 1]} : vector<8x64xf32> to vector<8x32xf32>
    %134 = arith.mulf %133, %112 : vector<8x32xf32>
    %135 = vector.extract_strided_slice %124 {offsets = [0, 0], sizes = [8, 32], strides = [1, 1]} : vector<8x64xf32> to vector<8x32xf32>
    %136 = arith.mulf %135, %126 : vector<8x32xf32>
    %137 = arith.addf %134, %136 : vector<8x32xf32>
    %138 = math.tanh %137 : vector<8x32xf32>
    %139 = arith.mulf %132, %138 : vector<8x32xf32>
    %140 = vector.extract_strided_slice %12 {offsets = [40, 0], sizes = [8, 128], strides = [1, 1]} : vector<64x128xf32> to vector<8x128xf32>
    %141 = arith.truncf %139 : vector<8x32xf32> to vector<8x32xbf16>
    %cst_24 = arith.constant dense<0.000000e+00> : vector<8x128xf32>
    %142 = tpu.matmul %141, %1, %cst_24 {dimension_numbers = #tpu.dot_dimension_numbers<[1], [0], [0], [1], [0, 0, 1, 1], [], []>} : vector<8x32xbf16>, vector<32x128xbf16>, vector<8x128xf32> -> vector<8x128xf32>
    %143 = arith.addf %140, %142 : vector<8x128xf32>
    %144 = vector.extract_strided_slice %143 {offsets = [0, 0], sizes = [8, 64], strides = [1, 1]} : vector<8x128xf32> to vector<8x64xf32>
    %145 = arith.negf %144 : vector<8x64xf32>
    %146 = math.exp %145 : vector<8x64xf32>
    %cst_25 = arith.constant 1.000000e+00 : f32
    %147 = vector.broadcast %cst_25 : f32 to vector<8x64xf32>
    %148 = arith.addf %147, %146 : vector<8x64xf32>
    %149 = arith.divf %147, %148 : vector<8x64xf32>
    %150 = vector.extract_strided_slice %143 {offsets = [0, 64], sizes = [8, 32], strides = [1, 1]} : vector<8x128xf32> to vector<8x32xf32>
    %151 = math.tanh %150 : vector<8x32xf32>
    %152 = vector.extract_strided_slice %143 {offsets = [0, 96], sizes = [8, 32], strides = [1, 1]} : vector<8x128xf32> to vector<8x32xf32>
    %153 = arith.negf %152 : vector<8x32xf32>
    %154 = math.exp %153 : vector<8x32xf32>
    %cst_26 = arith.constant 1.000000e+00 : f32
    %155 = vector.broadcast %cst_26 : f32 to vector<8x32xf32>
    %156 = arith.addf %155, %154 : vector<8x32xf32>
    %157 = arith.divf %155, %156 : vector<8x32xf32>
    %158 = vector.extract_strided_slice %149 {offsets = [0, 32], sizes = [8, 32], strides = [1, 1]} : vector<8x64xf32> to vector<8x32xf32>
    %159 = arith.mulf %158, %137 : vector<8x32xf32>
    %160 = vector.extract_strided_slice %149 {offsets = [0, 0], sizes = [8, 32], strides = [1, 1]} : vector<8x64xf32> to vector<8x32xf32>
    %161 = arith.mulf %160, %151 : vector<8x32xf32>
    %162 = arith.addf %159, %161 : vector<8x32xf32>
    %163 = math.tanh %162 : vector<8x32xf32>
    %164 = arith.mulf %157, %163 : vector<8x32xf32>
    %165 = vector.extract_strided_slice %12 {offsets = [48, 0], sizes = [8, 128], strides = [1, 1]} : vector<64x128xf32> to vector<8x128xf32>
    %166 = arith.truncf %164 : vector<8x32xf32> to vector<8x32xbf16>
    %cst_27 = arith.constant dense<0.000000e+00> : vector<8x128xf32>
    %167 = tpu.matmul %166, %1, %cst_27 {dimension_numbers = #tpu.dot_dimension_numbers<[1], [0], [0], [1], [0, 0, 1, 1], [], []>} : vector<8x32xbf16>, vector<32x128xbf16>, vector<8x128xf32> -> vector<8x128xf32>
    %168 = arith.addf %165, %167 : vector<8x128xf32>
    %169 = vector.extract_strided_slice %168 {offsets = [0, 0], sizes = [8, 64], strides = [1, 1]} : vector<8x128xf32> to vector<8x64xf32>
    %170 = arith.negf %169 : vector<8x64xf32>
    %171 = math.exp %170 : vector<8x64xf32>
    %cst_28 = arith.constant 1.000000e+00 : f32
    %172 = vector.broadcast %cst_28 : f32 to vector<8x64xf32>
    %173 = arith.addf %172, %171 : vector<8x64xf32>
    %174 = arith.divf %172, %173 : vector<8x64xf32>
    %175 = vector.extract_strided_slice %168 {offsets = [0, 64], sizes = [8, 32], strides = [1, 1]} : vector<8x128xf32> to vector<8x32xf32>
    %176 = math.tanh %175 : vector<8x32xf32>
    %177 = vector.extract_strided_slice %168 {offsets = [0, 96], sizes = [8, 32], strides = [1, 1]} : vector<8x128xf32> to vector<8x32xf32>
    %178 = arith.negf %177 : vector<8x32xf32>
    %179 = math.exp %178 : vector<8x32xf32>
    %cst_29 = arith.constant 1.000000e+00 : f32
    %180 = vector.broadcast %cst_29 : f32 to vector<8x32xf32>
    %181 = arith.addf %180, %179 : vector<8x32xf32>
    %182 = arith.divf %180, %181 : vector<8x32xf32>
    %183 = vector.extract_strided_slice %174 {offsets = [0, 32], sizes = [8, 32], strides = [1, 1]} : vector<8x64xf32> to vector<8x32xf32>
    %184 = arith.mulf %183, %162 : vector<8x32xf32>
    %185 = vector.extract_strided_slice %174 {offsets = [0, 0], sizes = [8, 32], strides = [1, 1]} : vector<8x64xf32> to vector<8x32xf32>
    %186 = arith.mulf %185, %176 : vector<8x32xf32>
    %187 = arith.addf %184, %186 : vector<8x32xf32>
    %188 = math.tanh %187 : vector<8x32xf32>
    %189 = arith.mulf %182, %188 : vector<8x32xf32>
    %190 = vector.extract_strided_slice %12 {offsets = [56, 0], sizes = [8, 128], strides = [1, 1]} : vector<64x128xf32> to vector<8x128xf32>
    %191 = arith.truncf %189 : vector<8x32xf32> to vector<8x32xbf16>
    %cst_30 = arith.constant dense<0.000000e+00> : vector<8x128xf32>
    %192 = tpu.matmul %191, %1, %cst_30 {dimension_numbers = #tpu.dot_dimension_numbers<[1], [0], [0], [1], [0, 0, 1, 1], [], []>} : vector<8x32xbf16>, vector<32x128xbf16>, vector<8x128xf32> -> vector<8x128xf32>
    %193 = arith.addf %190, %192 : vector<8x128xf32>
    %194 = vector.extract_strided_slice %193 {offsets = [0, 0], sizes = [8, 64], strides = [1, 1]} : vector<8x128xf32> to vector<8x64xf32>
    %195 = arith.negf %194 : vector<8x64xf32>
    %196 = math.exp %195 : vector<8x64xf32>
    %cst_31 = arith.constant 1.000000e+00 : f32
    %197 = vector.broadcast %cst_31 : f32 to vector<8x64xf32>
    %198 = arith.addf %197, %196 : vector<8x64xf32>
    %199 = arith.divf %197, %198 : vector<8x64xf32>
    %200 = vector.extract_strided_slice %193 {offsets = [0, 64], sizes = [8, 32], strides = [1, 1]} : vector<8x128xf32> to vector<8x32xf32>
    %201 = math.tanh %200 : vector<8x32xf32>
    %202 = vector.extract_strided_slice %193 {offsets = [0, 96], sizes = [8, 32], strides = [1, 1]} : vector<8x128xf32> to vector<8x32xf32>
    %203 = arith.negf %202 : vector<8x32xf32>
    %204 = math.exp %203 : vector<8x32xf32>
    %cst_32 = arith.constant 1.000000e+00 : f32
    %205 = vector.broadcast %cst_32 : f32 to vector<8x32xf32>
    %206 = arith.addf %205, %204 : vector<8x32xf32>
    %207 = arith.divf %205, %206 : vector<8x32xf32>
    %208 = vector.extract_strided_slice %199 {offsets = [0, 32], sizes = [8, 32], strides = [1, 1]} : vector<8x64xf32> to vector<8x32xf32>
    %209 = arith.mulf %208, %187 : vector<8x32xf32>
    %210 = vector.extract_strided_slice %199 {offsets = [0, 0], sizes = [8, 32], strides = [1, 1]} : vector<8x64xf32> to vector<8x32xf32>
    %211 = arith.mulf %210, %201 : vector<8x32xf32>
    %212 = arith.addf %209, %211 : vector<8x32xf32>
    %213 = math.tanh %212 : vector<8x32xf32>
    %214 = arith.mulf %207, %213 : vector<8x32xf32>
    %215 = arith.truncf %214 : vector<8x32xf32> to vector<8x32xbf16>
    %c0_33 = arith.constant 0 : index
    %c0_34 = arith.constant 0 : index
    %216 = vector.load %arg4[%c0_33, %c0_34] : memref<32x128xbf16, #tpu.memory_space<vmem>>, vector<32x128xbf16>
    %cst_35 = arith.constant dense<0.000000e+00> : vector<8x128xf32>
    %217 = tpu.matmul %215, %216, %cst_35 {dimension_numbers = #tpu.dot_dimension_numbers<[1], [0], [0], [1], [0, 0, 1, 1], [], []>} : vector<8x32xbf16>, vector<32x128xbf16>, vector<8x128xf32> -> vector<8x128xf32>
    %c0_36 = arith.constant 0 : index
    %c0_37 = arith.constant 0 : index
    %218 = vector.load %arg5[%c0_36, %c0_37] : memref<1x128xf32, #tpu.memory_space<vmem>>, vector<1x128xf32>
    %219 = vector.broadcast %218 : vector<1x128xf32> to vector<8x128xf32>
    %220 = arith.addf %217, %219 : vector<8x128xf32>
    %c0_38 = arith.constant 0 : index
    %c0_39 = arith.constant 0 : index
    %221 = vector.load %arg6[%c0_38, %c0_39] : memref<8x128xf32, #tpu.memory_space<vmem>>, vector<8x128xf32>
    tpu.vector_store %arg6[%c0_38, %c0_39], %220 {strides = array<i32>} : memref<8x128xf32, #tpu.memory_space<vmem>>, vector<8x128xf32>,
    return
  }
}

</mosaic_0001>

<llo_original>
// kernel: tpu_custom_call.1
$region0: #{tpu_custom_call.1}
  #allocation0 [shape = 'u32[]', space=smem, size = 0x4, offset = 0x4, fixed_abs, tag = 'smem constant byte address 0x4 - core index']
  #allocation1 [shape = 'u32[144,128]{1,0:T(1,128)}', space=vmem, size = 0x12000, scoped, tag = 'internal scratch']
  %s0 = inlined_call_operand.vmem [shape: s32[64,1], index: 0, kind: input, shape index: {}]
  %s1 = inlined_call_operand.vmem [shape: bf16[32,128], index: 1, kind: input, shape index: {}]
  %s2 = inlined_call_operand.vmem [shape: bf16[32,128], index: 2, kind: input, shape index: {}]
  %s3 = inlined_call_operand.vmem [shape: f32[1,128], index: 3, kind: input, shape index: {}]
  %s4 = inlined_call_operand.vmem [shape: bf16[32,128], index: 4, kind: input, shape index: {}]
  %s5 = inlined_call_operand.vmem [shape: f32[1,128], index: 5, kind: input, shape index: {}]
  %s6 = inlined_call_operand.hbm [shape: f32[8,128], index: 6, kind: output, shape index: {}]
  %s7 = sld [smem:[#allocation0]]
  $region34: #{tpu_custom_call.1} parent=0
    _
  %s9 = ssub.s32 1, %s7
  %s10 = scalar_select 0, %s9, %s7
  $region1: #{tpu_custom_call.1} parent=0
    #allocation2 [shape = 'u8[4096]{0}', space=vmem, size = 0x1000, scoped, tag = 'output window, operand 0, single buffered']
    #allocation3 [shape = 's32[1]{0}', space=sflag, size = 0x4, scoped, tag = 'scoped memory for tpu_custom_call.1']
    %11 = vsyncpa [#allocation3], 0
    // Predicated region
    $region2: #{tpu_custom_call.1} parent=1 // pred_check
      _
    $region3: #{tpu_custom_call.1} parent=1 // pred_check_branch
      %13 = sbr.rel (0) target = $region5
    $region4: #{tpu_custom_call.1} parent=1 // pred_region
      _
    $region5: #{tpu_custom_call.1} parent=1 // pred_fallthru
      _
    // Predicated region
    $region6: #{tpu_custom_call.1} parent=1 // pred_check
      _
    $region7: #{tpu_custom_call.1} parent=1 // pred_check_branch
      %15 = sbr.rel (0) target = $region9
    $region8: #{tpu_custom_call.1} parent=1 // pred_region
      _
    $region9: #{tpu_custom_call.1} parent=1 // pred_fallthru
      _
    // Predicated region
    $region10: #{tpu_custom_call.1} parent=1 // pred_check
      _
    $region11: #{tpu_custom_call.1} parent=1 // pred_check_branch
      %17 = sbr.rel (0) target = $region13
    $region12: #{tpu_custom_call.1} parent=1 // pred_region
      _
    $region13: #{tpu_custom_call.1} parent=1 // pred_fallthru
      _
    // Predicated region
    $region14: #{tpu_custom_call.1} parent=1 // pred_check
      _
    $region15: #{tpu_custom_call.1} parent=1 // pred_check_branch
      %19 = sbr.rel (0) target = $region17
    $region16: #{tpu_custom_call.1} parent=1 // pred_region
      _
    $region17: #{tpu_custom_call.1} parent=1 // pred_fallthru
      _
    // Predicated region
    $region18: #{tpu_custom_call.1} parent=1 // pred_check
      _
    $region19: #{tpu_custom_call.1} parent=1 // pred_check_branch
      %21 = sbr.rel (0) target = $region21
    $region20: #{tpu_custom_call.1} parent=1 // pred_region
      _
    $region21: #{tpu_custom_call.1} parent=1 // pred_fallthru
      _
    // Predicated region
    $region22: #{tpu_custom_call.1} parent=1 // pred_check
      _
    $region23: #{tpu_custom_call.1} parent=1 // pred_check_branch
      %23 = sbr.rel (0) target = $region25
    $region24: #{tpu_custom_call.1} parent=1 // pred_region
      _
    $region25: #{tpu_custom_call.1} parent=1 // pred_fallthru
      _
    %v25 = vld [vmem:[%s1] sm:$0xf]
    %v26 = vld [vmem:[%s1 + $0x4] sm:$0xf]
    %v27 = vld [vmem:[%s1 + $0x8] sm:$0xf]
    %v28 = vld [vmem:[%s1 + $0xc] sm:$0xf]
    %v29 = vld [vmem:[%s2] sm:$0xf]
    %v30 = vld [vmem:[%s2 + $0x4] sm:$0xf]
    %v31 = vld [vmem:[%s2 + $0x8] sm:$0xf]
    %v32 = vld [vmem:[%s2 + $0xc] sm:$0xf]
    %v33 = vld [vmem:[%s3] sm:$0x1]
    %v34 = vlaneseq
    %v35 = vand.u32 %v34, 127
    %v36 = vld [vmem:[%s0] sm:$0xff]
    %v37 = vld [vmem:[%s0 + $0x8] sm:$0xff]
    %v38 = vld [vmem:[%s0 + $0x10] sm:$0xff]
    %v39 = vld [vmem:[%s0 + $0x18] sm:$0xff]
    %v40 = vld [vmem:[%s0 + $0x20] sm:$0xff]
    %v41 = vld [vmem:[%s0 + $0x28] sm:$0xff]
    %v42 = vld [vmem:[%s0 + $0x30] sm:$0xff]
    %v43 = vld [vmem:[%s0 + $0x38] sm:$0xff]
    %44 = vset.pattern.permute.xlu0 0
    %45 = vperm.xlu0 %44, %v36
    %v46 = vpop.permute.xlu0 %45
    %47 = vset.pattern.permute.xlu0 0
    %48 = vperm.xlu0 %47, %v37
    %v49 = vpop.permute.xlu0 %48
    %50 = vset.pattern.permute.xlu0 0
    %51 = vperm.xlu0 %50, %v38
    %v52 = vpop.permute.xlu0 %51
    %53 = vset.pattern.permute.xlu0 0
    %54 = vperm.xlu0 %53, %v39
    %v55 = vpop.permute.xlu0 %54
    %56 = vset.pattern.permute.xlu0 0
    %57 = vperm.xlu0 %56, %v40
    %v58 = vpop.permute.xlu0 %57
    %59 = vset.pattern.permute.xlu0 0
    %60 = vperm.xlu0 %59, %v41
    %v61 = vpop.permute.xlu0 %60
    %62 = vset.pattern.permute.xlu0 0
    %63 = vperm.xlu0 %62, %v42
    %v64 = vpop.permute.xlu0 %63
    %65 = vset.pattern.permute.xlu0 0
    %66 = vperm.xlu0 %65, %v43
    %v67 = vpop.permute.xlu0 %66
    %vm68 = vcmp.eq.s32.totalorder %v35, %v46
    %vm69 = vcmp.eq.s32.totalorder %v35, %v49
    %vm70 = vcmp.eq.s32.totalorder %v35, %v52
    %vm71 = vcmp.eq.s32.totalorder %v35, %v55
    %vm72 = vcmp.eq.s32.totalorder %v35, %v58
    %vm73 = vcmp.eq.s32.totalorder %v35, %v61
    %vm74 = vcmp.eq.s32.totalorder %v35, %v64
    %vm75 = vcmp.eq.s32.totalorder %v35, %v67
    %v76 = vsel %vm68, 1, 0
    %v77 = vsel %vm69, 1, 0
    %v78 = vsel %vm70, 1, 0
    %v79 = vsel %vm71, 1, 0
    %v80 = vsel %vm72, 1, 0
    %v81 = vsel %vm73, 1, 0
    %v82 = vsel %vm74, 1, 0
    %v83 = vsel %vm75, 1, 0
    %v84 = vcvt.s32.f32 %v76
    %v85 = vcvt.s32.f32 %v77
    %v86 = vcvt.s32.f32 %v78
    %v87 = vcvt.s32.f32 %v79
    %v88 = vcvt.s32.f32 %v80
    %v89 = vcvt.s32.f32 %v81
    %v90 = vcvt.s32.f32 %v82
    %v91 = vcvt.s32.f32 %v83
    %v92 = vpack.c.bf16 %v85, %v84
    %v93 = vpack.c.bf16 %v87, %v86
    %v94 = vpack.c.bf16 %v89, %v88
    %v95 = vpack.c.bf16 %v91, %v90
    %v97 = vlaneseq
    %v98 = vshrl.u32 %v97, 7
    %v99 = vsub.s32 0, %v98
    %v100 = vrot.slane %v33, %v99
    %v106 = vunpack.c.l.b16 %v25
    %v107 = vunpack.c.l.b16 %v26
    %v108 = vunpack.c.l.b16 %v27
    %v109 = vunpack.c.l.b16 %v28
    %v110 = vpack.c.b16 %v107, %v106
    %v111 = vpack.c.b16 %v109, %v108
    %vm114 = vcmask 261120
    %v116 = vsel %vm114, %v92, 0
    %v119 = vsel %vm114, %v93, 0
    %v122 = vsel %vm114, %v94, 0
    %v125 = vsel %vm114, %v95, 0
    %127 = vmatprep.subr.bf16.mxu0 0
    %128 = vmatpush1.bf16.msra.mxu0 %v110
    %129 = vmatprep.subr.bf16.mxu0 0
    %130 = vmatpush1.bf16.msra.mxu0 %v111
    %131 = vmatprep.subr.bf16.mxu0 0
    %132 = vmatpush1.bf16.msra.mxu0 0
    %133 = vmatprep.subr.bf16.mxu0 0
    %134 = vmatpush1.bf16.msra.mxu0 0
    %135 = vmatprep.subr.bf16.mxu0 0
    %136 = vmatpush1.bf16.msra.mxu0 0
    %137 = vmatprep.subr.bf16.mxu0 0
    %138 = vmatpush1.bf16.msra.mxu0 0
    %139 = vmatprep.subr.bf16.mxu0 0
    %140 = vmatpush1.bf16.msra.mxu0 0
    %141 = vmatprep.subr.bf16.mxu0 0
    %142 = vmatpush1.bf16.msra.mxu0 0
    %143 = vmatprep.subr.bf16.mxu0 0
    %144 = vmatpush1.bf16.msra.mxu0 0
    %145 = vmatprep.subr.bf16.mxu0 0
    %146 = vmatpush1.bf16.msra.mxu0 0
    %147 = vmatprep.subr.bf16.mxu0 0
    %148 = vmatpush1.bf16.msra.mxu0 0
    %149 = vmatprep.subr.bf16.mxu0 0
    %150 = vmatpush1.bf16.msra.mxu0 0
    %151 = vmatprep.subr.bf16.mxu0 0
    %152 = vmatpush1.bf16.msra.mxu0 0
    %153 = vmatprep.subr.bf16.mxu0 0
    %154 = vmatpush1.bf16.msra.mxu0 0
    %155 = vmatprep.subr.bf16.mxu0 0
    %156 = vmatpush1.bf16.msra.mxu0 0
    %157 = vmatprep.subr.bf16.mxu0 0
    %158 = vmatpush1.bf16.msra.mxu0 0
    %159 = vmatprep.mubr.bf16.mxu0 0
    %160 = vmatmul.mubr.bf16.gmra.mrb[0].mxu0 %v116
    %v161 = vpop.f32.mrb[0].mxu0
    %v162 = vadd.f32 %v100, %v161
    %v163 = vpop.f32.mrb[0].mxu0
    %v164 = vpop.f32.mrb[0].mxu0
    %v165 = vadd.f32 %v100, %v164
    %v166 = vpop.f32.mrb[0].mxu0
    %167 = vmatprep.mubr.bf16.mxu0 0
    %168 = vmatmul.mubr.bf16.gmra.mrb[0].mxu0 %v119
    %v169 = vpop.f32.mrb[0].mxu0
    %v170 = vadd.f32 %v100, %v169
    %v171 = vpop.f32.mrb[0].mxu0
    %v172 = vpop.f32.mrb[0].mxu0
    %v173 = vadd.f32 %v100, %v172
    %v174 = vpop.f32.mrb[0].mxu0
    %175 = vmatprep.mubr.bf16.mxu0 0
    %176 = vmatmul.mubr.bf16.gmra.mrb[0].mxu0 %v122
    %v177 = vpop.f32.mrb[0].mxu0
    %v178 = vadd.f32 %v100, %v177
    %v179 = vpop.f32.mrb[0].mxu0
    %v180 = vpop.f32.mrb[0].mxu0
    %v181 = vadd.f32 %v100, %v180
    %v182 = vpop.f32.mrb[0].mxu0
    %183 = vmatprep.mubr.bf16.mxu0 0
    %184 = vmatmul.mubr.bf16.gmra.mrb[0].mxu0 %v125
    %v185 = vpop.f32.mrb[0].mxu0
    %v186 = vadd.f32 %v100, %v185
    %v187 = vpop.f32.mrb[0].mxu0
    %v188 = vpop.f32.mrb[0].mxu0
    %v189 = vadd.f32 %v100, %v188
    %v190 = vpop.f32.mrb[0].mxu0
    %191 = vdwg.mxu0
    %v196 = vunpack.c.l.b16 %v29
    %v197 = vunpack.c.l.b16 %v30
    %v198 = vunpack.c.l.b16 %v31
    %v199 = vunpack.c.l.b16 %v32
    %v200 = vpack.c.b16 %v197, %v196
    %v201 = vpack.c.b16 %v199, %v198
    %v205 = vsel %vm114, 0, 0
    %207 = vmatprep.subr.bf16.mxu0 0
    %208 = vmatpush1.bf16.msra.mxu0 %v200
    %209 = vmatprep.subr.bf16.mxu0 0
    %210 = vmatpush1.bf16.msra.mxu0 %v201
    %211 = vmatprep.subr.bf16.mxu0 0
    %212 = vmatpush1.bf16.msra.mxu0 0
    %213 = vmatprep.subr.bf16.mxu0 0
    %214 = vmatpush1.bf16.msra.mxu0 0
    %215 = vmatprep.subr.bf16.mxu0 0
    %216 = vmatpush1.bf16.msra.mxu0 0
    %217 = vmatprep.subr.bf16.mxu0 0
    %218 = vmatpush1.bf16.msra.mxu0 0
    %219 = vmatprep.subr.bf16.mxu0 0
    %220 = vmatpush1.bf16.msra.mxu0 0
    %221 = vmatprep.subr.bf16.mxu0 0
    %222 = vmatpush1.bf16.msra.mxu0 0
    %223 = vmatprep.subr.bf16.mxu0 0
    %224 = vmatpush1.bf16.msra.mxu0 0
    %225 = vmatprep.subr.bf16.mxu0 0
    %226 = vmatpush1.bf16.msra.mxu0 0
    %227 = vmatprep.subr.bf16.mxu0 0
    %228 = vmatpush1.bf16.msra.mxu0 0
    %229 = vmatprep.subr.bf16.mxu0 0
    %230 = vmatpush1.bf16.msra.mxu0 0
    %231 = vmatprep.subr.bf16.mxu0 0
    %232 = vmatpush1.bf16.msra.mxu0 0
    %233 = vmatprep.subr.bf16.mxu0 0
    %234 = vmatpush1.bf16.msra.mxu0 0
    %235 = vmatprep.subr.bf16.mxu0 0
    %236 = vmatpush1.bf16.msra.mxu0 0
    %237 = vmatprep.subr.bf16.mxu0 0
    %238 = vmatpush1.bf16.msra.mxu0 0
    %239 = vmatprep.mubr.bf16.mxu0 0
    %240 = vmatmul.mubr.bf16.gmra.mrb[0].mxu0 %v205
    %v241 = vpop.f32.mrb[0].mxu0
    %v242 = vadd.f32 0.0, %v241
    %v243 = vpop.f32.mrb[0].mxu0
    %v244 = vpop.f32.mrb[0].mxu0
    %v245 = vpop.f32.mrb[0].mxu0
    %246 = vdwg.mxu0
    %v247 = vadd.f32 %v162, %v242
    %v248 = vxor.u32 %v247, 2147483648
    %v249 = vmul.f32 %v248, 1.442695
    %v250 = vpow.pop %v249
    %v251 = vadd.f32 %v250, 1.0
    %v252 = vrcp.pop %v251
    %v253 = vmul.f32 1.0, %v252
    %v254 = vtanh.pop %v247
    %v255 = vmul.f32 %v253, 0.0
    %257 = vrot.lane.b32.xlu0 %v254, 64
    %v258 = vpop.permute.xlu0 %257
    %v260 = vmul.f32 %v253, %v258
    %262 = vrot.lane.b32.xlu0 %v260, 32
    %v263 = vpop.permute.xlu0 %262
    %v265 = vadd.f32 %v255, %v263
    %v266 = vtanh.pop %v265
    %268 = vrot.lane.b32.xlu0 %v266, 64
    %v269 = vpop.permute.xlu0 %268
    %v271 = vmul.f32 %v253, %v269
    %v272 = vpack.c.bf16 %v271, %v271
    %274 = vrot.lane.b32.xlu0 %v272, 32
    %v275 = vpop.permute.xlu0 %274
    %v277 = vsel %vm114, %v275, 0
    %279 = vmatprep.subr.bf16.mxu0 0
    %280 = vmatpush1.bf16.msra.mxu0 %v200
    %281 = vmatprep.subr.bf16.mxu0 0
    %282 = vmatpush1.bf16.msra.mxu0 %v201
    %283 = vmatprep.subr.bf16.mxu0 0
    %284 = vmatpush1.bf16.msra.mxu0 0
    %285 = vmatprep.subr.bf16.mxu0 0
    %286 = vmatpush1.bf16.msra.mxu0 0
    %287 = vmatprep.subr.bf16.mxu0 0
    %288 = vmatpush1.bf16.msra.mxu0 0
    %289 = vmatprep.subr.bf16.mxu0 0
    %290 = vmatpush1.bf16.msra.mxu0 0
    %291 = vmatprep.subr.bf16.mxu0 0
    %292 = vmatpush1.bf16.msra.mxu0 0
    %293 = vmatprep.subr.bf16.mxu0 0
    %294 = vmatpush1.bf16.msra.mxu0 0
    %295 = vmatprep.subr.bf16.mxu0 0
    %296 = vmatpush1.bf16.msra.mxu0 0
    %297 = vmatprep.subr.bf16.mxu0 0
    %298 = vmatpush1.bf16.msra.mxu0 0
    %299 = vmatprep.subr.bf16.mxu0 0
    %300 = vmatpush1.bf16.msra.mxu0 0
    %301 = vmatprep.subr.bf16.mxu0 0
    %302 = vmatpush1.bf16.msra.mxu0 0
    %303 = vmatprep.subr.bf16.mxu0 0
    %304 = vmatpush1.bf16.msra.mxu0 0
    %305 = vmatprep.subr.bf16.mxu0 0
    %306 = vmatpush1.bf16.msra.mxu0 0
    %307 = vmatprep.subr.bf16.mxu0 0
    %308 = vmatpush1.bf16.msra.mxu0 0
    %309 = vmatprep.subr.bf16.mxu0 0
    %310 = vmatpush1.bf16.msra.mxu0 0
    %311 = vmatprep.mubr.bf16.mxu0 0
    %312 = vmatmul.mubr.bf16.gmra.mrb[0].mxu0 %v277
    %v313 = vpop.f32.mrb[0].mxu0
    %v314 = vadd.f32 0.0, %v313
    %v315 = vpop.f32.mrb[0].mxu0
    %v316 = vpop.f32.mrb[0].mxu0
    %v317 = vpop.f32.mrb[0].mxu0
    %318 = vdwg.mxu0
    %v319 = vadd.f32 %v165, %v314
    %v320 = vxor.u32 %v319, 2147483648
    %v321 = vmul.f32 %v320, 1.442695
    %v322 = vpow.pop %v321
    %v323 = vadd.f32 %v322, 1.0
    %v324 = vrcp.pop %v323
    %v325 = vmul.f32 1.0, %v324
    %v326 = vtanh.pop %v319
    %v327 = vmul.f32 %v325, %v265
    %329 = vrot.lane.b32.xlu0 %v326, 64
    %v330 = vpop.permute.xlu0 %329
    %v332 = vmul.f32 %v325, %v330
    %334 = vrot.lane.b32.xlu0 %v332, 32
    %v335 = vpop.permute.xlu0 %334
    %v337 = vadd.f32 %v327, %v335
    %v338 = vtanh.pop %v337
    %340 = vrot.lane.b32.xlu0 %v338, 64
    %v341 = vpop.permute.xlu0 %340
    %v343 = vmul.f32 %v325, %v341
    %v344 = vpack.c.bf16 %v343, %v343
    %346 = vrot.lane.b32.xlu0 %v344, 32
    %v347 = vpop.permute.xlu0 %346
    %v349 = vsel %vm114, %v347, 0
    %351 = vmatprep.subr.bf16.mxu0 0
    %352 = vmatpush1.bf16.msra.mxu0 %v200
    %353 = vmatprep.subr.bf16.mxu0 0
    %354 = vmatpush1.bf16.msra.mxu0 %v201
    %355 = vmatprep.subr.bf16.mxu0 0
    %356 = vmatpush1.bf16.msra.mxu0 0
    %357 = vmatprep.subr.bf16.mxu0 0
    %358 = vmatpush1.bf16.msra.mxu0 0
    %359 = vmatprep.subr.bf16.mxu0 0
    %360 = vmatpush1.bf16.msra.mxu0 0
    %361 = vmatprep.subr.bf16.mxu0 0
    %362 = vmatpush1.bf16.msra.mxu0 0
    %363 = vmatprep.subr.bf16.mxu0 0
    %364 = vmatpush1.bf16.msra.mxu0 0
    %365 = vmatprep.subr.bf16.mxu0 0
    %366 = vmatpush1.bf16.msra.mxu0 0
    %367 = vmatprep.subr.bf16.mxu0 0
    %368 = vmatpush1.bf16.msra.mxu0 0
    %369 = vmatprep.subr.bf16.mxu0 0
    %370 = vmatpush1.bf16.msra.mxu0 0
    %371 = vmatprep.subr.bf16.mxu0 0
    %372 = vmatpush1.bf16.msra.mxu0 0
    %373 = vmatprep.subr.bf16.mxu0 0
    %374 = vmatpush1.bf16.msra.mxu0 0
    %375 = vmatprep.subr.bf16.mxu0 0
    %376 = vmatpush1.bf16.msra.mxu0 0
    %377 = vmatprep.subr.bf16.mxu0 0
    %378 = vmatpush1.bf16.msra.mxu0 0
    %379 = vmatprep.subr.bf16.mxu0 0
    %380 = vmatpush1.bf16.msra.mxu0 0
    %381 = vmatprep.subr.bf16.mxu0 0
    %382 = vmatpush1.bf16.msra.mxu0 0
    %383 = vmatprep.mubr.bf16.mxu0 0
    %384 = vmatmul.mubr.bf16.gmra.mrb[0].mxu0 %v349
    %v385 = vpop.f32.mrb[0].mxu0
    %v386 = vadd.f32 0.0, %v385
    %v387 = vpop.f32.mrb[0].mxu0
    %v388 = vpop.f32.mrb[0].mxu0
    %v389 = vpop.f32.mrb[0].mxu0
    %390 = vdwg.mxu0
    %v391 = vadd.f32 %v170, %v386
    %v392 = vxor.u32 %v391, 2147483648
    %v393 = vmul.f32 %v392, 1.442695
    %v394 = vpow.pop %v393
    %v395 = vadd.f32 %v394, 1.0
    %v396 = vrcp.pop %v395
    %v397 = vmul.f32 1.0, %v396
    %v398 = vtanh.pop %v391
    %v399 = vmul.f32 %v397, %v337
    %401 = vrot.lane.b32.xlu0 %v398, 64
    %v402 = vpop.permute.xlu0 %401
    %v404 = vmul.f32 %v397, %v402
    %406 = vrot.lane.b32.xlu0 %v404, 32
    %v407 = vpop.permute.xlu0 %406
    %v409 = vadd.f32 %v399, %v407
    %v410 = vtanh.pop %v409
    %412 = vrot.lane.b32.xlu0 %v410, 64
    %v413 = vpop.permute.xlu0 %412
    %v415 = vmul.f32 %v397, %v413
    %v416 = vpack.c.bf16 %v415, %v415
    %418 = vrot.lane.b32.xlu0 %v416, 32
    %v419 = vpop.permute.xlu0 %418
    %v421 = vsel %vm114, %v419, 0
    %423 = vmatprep.subr.bf16.mxu0 0
    %424 = vmatpush1.bf16.msra.mxu0 %v200
    %425 = vmatprep.subr.bf16.mxu0 0
    %426 = vmatpush1.bf16.msra.mxu0 %v201
    %427 = vmatprep.subr.bf16.mxu0 0
    %428 = vmatpush1.bf16.msra.mxu0 0
    %429 = vmatprep.subr.bf16.mxu0 0
    %430 = vmatpush1.bf16.msra.mxu0 0
    %431 = vmatprep.subr.bf16.mxu0 0
    %432 = vmatpush1.bf16.msra.mxu0 0
    %433 = vmatprep.subr.bf16.mxu0 0
    %434 = vmatpush1.bf16.msra.mxu0 0
    %435 = vmatprep.subr.bf16.mxu0 0
    %436 = vmatpush1.bf16.msra.mxu0 0
    %437 = vmatprep.subr.bf16.mxu0 0
    %438 = vmatpush1.bf16.msra.mxu0 0
    %439 = vmatprep.subr.bf16.mxu0 0
    %440 = vmatpush1.bf16.msra.mxu0 0
    %441 = vmatprep.subr.bf16.mxu0 0
    %442 = vmatpush1.bf16.msra.mxu0 0
    %443 = vmatprep.subr.bf16.mxu0 0
    %444 = vmatpush1.bf16.msra.mxu0 0
    %445 = vmatprep.subr.bf16.mxu0 0
    %446 = vmatpush1.bf16.msra.mxu0 0
    %447 = vmatprep.subr.bf16.mxu0 0
    %448 = vmatpush1.bf16.msra.mxu0 0
    %449 = vmatprep.subr.bf16.mxu0 0
    %450 = vmatpush1.bf16.msra.mxu0 0
    %451 = vmatprep.subr.bf16.mxu0 0
    %452 = vmatpush1.bf16.msra.mxu0 0
    %453 = vmatprep.subr.bf16.mxu0 0
    %454 = vmatpush1.bf16.msra.mxu0 0
    %455 = vmatprep.mubr.bf16.mxu0 0
    %456 = vmatmul.mubr.bf16.gmra.mrb[0].mxu0 %v421
    %v457 = vpop.f32.mrb[0].mxu0
    %v458 = vadd.f32 0.0, %v457
    %v459 = vpop.f32.mrb[0].mxu0
    %v460 = vpop.f32.mrb[0].mxu0
    %v461 = vpop.f32.mrb[0].mxu0
    %462 = vdwg.mxu0
    %v463 = vadd.f32 %v173, %v458
    %v464 = vxor.u32 %v463, 2147483648
    %v465 = vmul.f32 %v464, 1.442695
    %v466 = vpow.pop %v465
    %v467 = vadd.f32 %v466, 1.0
    %v468 = vrcp.pop %v467
    %v469 = vmul.f32 1.0, %v468
    %v470 = vtanh.pop %v463
    %v471 = vmul.f32 %v469, %v409
    %473 = vrot.lane.b32.xlu0 %v470, 64
    %v474 = vpop.permute.xlu0 %473
    %v476 = vmul.f32 %v469, %v474
    %478 = vrot.lane.b32.xlu0 %v476, 32
    %v479 = vpop.permute.xlu0 %478
    %v481 = vadd.f32 %v471, %v479
    %v482 = vtanh.pop %v481
    %484 = vrot.lane.b32.xlu0 %v482, 64
    %v485 = vpop.permute.xlu0 %484
    %v487 = vmul.f32 %v469, %v485
    %v488 = vpack.c.bf16 %v487, %v487
    %490 = vrot.lane.b32.xlu0 %v488, 32
    %v491 = vpop.permute.xlu0 %490
    %v493 = vsel %vm114, %v491, 0
    %495 = vmatprep.subr.bf16.mxu0 0
    %496 = vmatpush1.bf16.msra.mxu0 %v200
    %497 = vmatprep.subr.bf16.mxu0 0
    %498 = vmatpush1.bf16.msra.mxu0 %v201
    %499 = vmatprep.subr.bf16.mxu0 0
    %500 = vmatpush1.bf16.msra.mxu0 0
    %501 = vmatprep.subr.bf16.mxu0 0
    %502 = vmatpush1.bf16.msra.mxu0 0
    %503 = vmatprep.subr.bf16.mxu0 0
    %504 = vmatpush1.bf16.msra.mxu0 0
    %505 = vmatprep.subr.bf16.mxu0 0
    %506 = vmatpush1.bf16.msra.mxu0 0
    %507 = vmatprep.subr.bf16.mxu0 0
    %508 = vmatpush1.bf16.msra.mxu0 0
    %509 = vmatprep.subr.bf16.mxu0 0
    %510 = vmatpush1.bf16.msra.mxu0 0
    %511 = vmatprep.subr.bf16.mxu0 0
    %512 = vmatpush1.bf16.msra.mxu0 0
    %513 = vmatprep.subr.bf16.mxu0 0
    %514 = vmatpush1.bf16.msra.mxu0 0
    %515 = vmatprep.subr.bf16.mxu0 0
    %516 = vmatpush1.bf16.msra.mxu0 0
    %517 = vmatprep.subr.bf16.mxu0 0
    %518 = vmatpush1.bf16.msra.mxu0 0
    %519 = vmatprep.subr.bf16.mxu0 0
    %520 = vmatpush1.bf16.msra.mxu0 0
    %521 = vmatprep.subr.bf16.mxu0 0
    %522 = vmatpush1.bf16.msra.mxu0 0
    %523 = vmatprep.subr.bf16.mxu0 0
    %524 = vmatpush1.bf16.msra.mxu0 0
    %525 = vmatprep.subr.bf16.mxu0 0
    %526 = vmatpush1.bf16.msra.mxu0 0
    %527 = vmatprep.mubr.bf16.mxu0 0
    %528 = vmatmul.mubr.bf16.gmra.mrb[0].mxu0 %v493
    %v529 = vpop.f32.mrb[0].mxu0
    %v530 = vadd.f32 0.0, %v529
    %v531 = vpop.f32.mrb[0].mxu0
    %v532 = vpop.f32.mrb[0].mxu0
    %v533 = vpop.f32.mrb[0].mxu0
    %534 = vdwg.mxu0
    %v535 = vadd.f32 %v178, %v530
    %v536 = vxor.u32 %v535, 2147483648
    %v537 = vmul.f32 %v536, 1.442695
    %v538 = vpow.pop %v537
    %v539 = vadd.f32 %v538, 1.0
    %v540 = vrcp.pop %v539
    %v541 = vmul.f32 1.0, %v540
    %v542 = vtanh.pop %v535
    %v543 = vmul.f32 %v541, %v481
    %545 = vrot.lane.b32.xlu0 %v542, 64
    %v546 = vpop.permute.xlu0 %545
    %v548 = vmul.f32 %v541, %v546
    %550 = vrot.lane.b32.xlu0 %v548, 32
    %v551 = vpop.permute.xlu0 %550
    %v553 = vadd.f32 %v543, %v551
    %v554 = vtanh.pop %v553
    %556 = vrot.lane.b32.xlu0 %v554, 64
    %v557 = vpop.permute.xlu0 %556
    %v559 = vmul.f32 %v541, %v557
    %v560 = vpack.c.bf16 %v559, %v559
    %562 = vrot.lane.b32.xlu0 %v560, 32
    %v563 = vpop.permute.xlu0 %562
    %v565 = vsel %vm114, %v563, 0
    %567 = vmatprep.subr.bf16.mxu0 0
    %568 = vmatpush1.bf16.msra.mxu0 %v200
    %569 = vmatprep.subr.bf16.mxu0 0
    %570 = vmatpush1.bf16.msra.mxu0 %v201
    %571 = vmatprep.subr.bf16.mxu0 0
    %572 = vmatpush1.bf16.msra.mxu0 0
    %573 = vmatprep.subr.bf16.mxu0 0
    %574 = vmatpush1.bf16.msra.mxu0 0
    %575 = vmatprep.subr.bf16.mxu0 0
    %576 = vmatpush1.bf16.msra.mxu0 0
    %577 = vmatprep.subr.bf16.mxu0 0
    %578 = vmatpush1.bf16.msra.mxu0 0
    %579 = vmatprep.subr.bf16.mxu0 0
    %580 = vmatpush1.bf16.msra.mxu0 0
    %581 = vmatprep.subr.bf16.mxu0 0
    %582 = vmatpush1.bf16.msra.mxu0 0
    %583 = vmatprep.subr.bf16.mxu0 0
    %584 = vmatpush1.bf16.msra.mxu0 0
    %585 = vmatprep.subr.bf16.mxu0 0
    %586 = vmatpush1.bf16.msra.mxu0 0
    %587 = vmatprep.subr.bf16.mxu0 0
    %588 = vmatpush1.bf16.msra.mxu0 0
    %589 = vmatprep.subr.bf16.mxu0 0
    %590 = vmatpush1.bf16.msra.mxu0 0
    %591 = vmatprep.subr.bf16.mxu0 0
    %592 = vmatpush1.bf16.msra.mxu0 0
    %593 = vmatprep.subr.bf16.mxu0 0
    %594 = vmatpush1.bf16.msra.mxu0 0
    %595 = vmatprep.subr.bf16.mxu0 0
    %596 = vmatpush1.bf16.msra.mxu0 0
    %597 = vmatprep.subr.bf16.mxu0 0
    %598 = vmatpush1.bf16.msra.mxu0 0
    %599 = vmatprep.mubr.bf16.mxu0 0
    %600 = vmatmul.mubr.bf16.gmra.mrb[0].mxu0 %v565
    %v601 = vpop.f32.mrb[0].mxu0
    %v602 = vadd.f32 0.0, %v601
    %v603 = vpop.f32.mrb[0].mxu0
    %v604 = vpop.f32.mrb[0].mxu0
    %v605 = vpop.f32.mrb[0].mxu0
    %606 = vdwg.mxu0
    %v607 = vadd.f32 %v181, %v602
    %v608 = vxor.u32 %v607, 2147483648
    %v609 = vmul.f32 %v608, 1.442695
    %v610 = vpow.pop %v609
    %v611 = vadd.f32 %v610, 1.0
    %v612 = vrcp.pop %v611
    %v613 = vmul.f32 1.0, %v612
    %v614 = vtanh.pop %v607
    %v615 = vmul.f32 %v613, %v553
    %617 = vrot.lane.b32.xlu0 %v614, 64
    %v618 = vpop.permute.xlu0 %617
    %v620 = vmul.f32 %v613, %v618
    %622 = vrot.lane.b32.xlu0 %v620, 32
    %v623 = vpop.permute.xlu0 %622
    %v625 = vadd.f32 %v615, %v623
    %v626 = vtanh.pop %v625
    %628 = vrot.lane.b32.xlu0 %v626, 64
    %v629 = vpop.permute.xlu0 %628
    %v631 = vmul.f32 %v613, %v629
    %v632 = vpack.c.bf16 %v631, %v631
    %634 = vrot.lane.b32.xlu0 %v632, 32
    %v635 = vpop.permute.xlu0 %634
    %v637 = vsel %vm114, %v635, 0
    %639 = vmatprep.subr.bf16.mxu0 0
    %640 = vmatpush1.bf16.msra.mxu0 %v200
    %641 = vmatprep.subr.bf16.mxu0 0
    %642 = vmatpush1.bf16.msra.mxu0 %v201
    %643 = vmatprep.subr.bf16.mxu0 0
    %644 = vmatpush1.bf16.msra.mxu0 0
    %645 = vmatprep.subr.bf16.mxu0 0
    %646 = vmatpush1.bf16.msra.mxu0 0
    %647 = vmatprep.subr.bf16.mxu0 0
    %648 = vmatpush1.bf16.msra.mxu0 0
    %649 = vmatprep.subr.bf16.mxu0 0
    %650 = vmatpush1.bf16.msra.mxu0 0
    %651 = vmatprep.subr.bf16.mxu0 0
    %652 = vmatpush1.bf16.msra.mxu0 0
    %653 = vmatprep.subr.bf16.mxu0 0
    %654 = vmatpush1.bf16.msra.mxu0 0
    %655 = vmatprep.subr.bf16.mxu0 0
    %656 = vmatpush1.bf16.msra.mxu0 0
    %657 = vmatprep.subr.bf16.mxu0 0
    %658 = vmatpush1.bf16.msra.mxu0 0
    %659 = vmatprep.subr.bf16.mxu0 0
    %660 = vmatpush1.bf16.msra.mxu0 0
    %661 = vmatprep.subr.bf16.mxu0 0
    %662 = vmatpush1.bf16.msra.mxu0 0
    %663 = vmatprep.subr.bf16.mxu0 0
    %664 = vmatpush1.bf16.msra.mxu0 0
    %665 = vmatprep.subr.bf16.mxu0 0
    %666 = vmatpush1.bf16.msra.mxu0 0
    %667 = vmatprep.subr.bf16.mxu0 0
    %668 = vmatpush1.bf16.msra.mxu0 0
    %669 = vmatprep.subr.bf16.mxu0 0
    %670 = vmatpush1.bf16.msra.mxu0 0
    %671 = vmatprep.mubr.bf16.mxu0 0
    %672 = vmatmul.mubr.bf16.gmra.mrb[0].mxu0 %v637
    %v673 = vpop.f32.mrb[0].mxu0
    %v674 = vadd.f32 0.0, %v673
    %v675 = vpop.f32.mrb[0].mxu0
    %v676 = vpop.f32.mrb[0].mxu0
    %v677 = vpop.f32.mrb[0].mxu0
    %678 = vdwg.mxu0
    %v679 = vadd.f32 %v186, %v674
    %v680 = vxor.u32 %v679, 2147483648
    %v681 = vmul.f32 %v680, 1.442695
    %v682 = vpow.pop %v681
    %v683 = vadd.f32 %v682, 1.0
    %v684 = vrcp.pop %v683
    %v685 = vmul.f32 1.0, %v684
    %v686 = vtanh.pop %v679
    %v687 = vmul.f32 %v685, %v625
    %689 = vrot.lane.b32.xlu0 %v686, 64
    %v690 = vpop.permute.xlu0 %689
    %v692 = vmul.f32 %v685, %v690
    %694 = vrot.lane.b32.xlu0 %v692, 32
    %v695 = vpop.permute.xlu0 %694
    %v697 = vadd.f32 %v687, %v695
    %v698 = vtanh.pop %v697
    %700 = vrot.lane.b32.xlu0 %v698, 64
    %v701 = vpop.permute.xlu0 %700
    %v703 = vmul.f32 %v685, %v701
    %v704 = vpack.c.bf16 %v703, %v703
    %706 = vrot.lane.b32.xlu0 %v704, 32
    %v707 = vpop.permute.xlu0 %706
    %v709 = vsel %vm114, %v707, 0
    %711 = vmatprep.subr.bf16.mxu0 0
    %712 = vmatpush1.bf16.msra.mxu0 %v200
    %713 = vmatprep.subr.bf16.mxu0 0
    %714 = vmatpush1.bf16.msra.mxu0 %v201
    %715 = vmatprep.subr.bf16.mxu0 0
    %716 = vmatpush1.bf16.msra.mxu0 0
    %717 = vmatprep.subr.bf16.mxu0 0
    %718 = vmatpush1.bf16.msra.mxu0 0
    %719 = vmatprep.subr.bf16.mxu0 0
    %720 = vmatpush1.bf16.msra.mxu0 0
    %721 = vmatprep.subr.bf16.mxu0 0
    %722 = vmatpush1.bf16.msra.mxu0 0
    %723 = vmatprep.subr.bf16.mxu0 0
    %724 = vmatpush1.bf16.msra.mxu0 0
    %725 = vmatprep.subr.bf16.mxu0 0
    %726 = vmatpush1.bf16.msra.mxu0 0
    %727 = vmatprep.subr.bf16.mxu0 0
    %728 = vmatpush1.bf16.msra.mxu0 0
    %729 = vmatprep.subr.bf16.mxu0 0
    %730 = vmatpush1.bf16.msra.mxu0 0
    %731 = vmatprep.subr.bf16.mxu0 0
    %732 = vmatpush1.bf16.msra.mxu0 0
    %733 = vmatprep.subr.bf16.mxu0 0
    %734 = vmatpush1.bf16.msra.mxu0 0
    %735 = vmatprep.subr.bf16.mxu0 0
    %736 = vmatpush1.bf16.msra.mxu0 0
    %737 = vmatprep.subr.bf16.mxu0 0
    %738 = vmatpush1.bf16.msra.mxu0 0
    %739 = vmatprep.subr.bf16.mxu0 0
    %740 = vmatpush1.bf16.msra.mxu0 0
    %741 = vmatprep.subr.bf16.mxu0 0
    %742 = vmatpush1.bf16.msra.mxu0 0
    %743 = vmatprep.mubr.bf16.mxu0 0
    %744 = vmatmul.mubr.bf16.gmra.mrb[0].mxu0 %v709
    %v745 = vpop.f32.mrb[0].mxu0
    %v746 = vadd.f32 0.0, %v745
    %v747 = vpop.f32.mrb[0].mxu0
    %v748 = vpop.f32.mrb[0].mxu0
    %v749 = vpop.f32.mrb[0].mxu0
    %750 = vdwg.mxu0
    %v751 = vadd.f32 %v189, %v746
    %v752 = vxor.u32 %v751, 2147483648
    %v753 = vmul.f32 %v752, 1.442695
    %v754 = vpow.pop %v753
    %v755 = vadd.f32 %v754, 1.0
    %v756 = vrcp.pop %v755
    %v757 = vmul.f32 1.0, %v756
    %v758 = vtanh.pop %v751
    %v759 = vmul.f32 %v757, %v697
    %761 = vrot.lane.b32.xlu0 %v758, 64
    %v762 = vpop.permute.xlu0 %761
    %v764 = vmul.f32 %v757, %v762
    %766 = vrot.lane.b32.xlu0 %v764, 32
    %v767 = vpop.permute.xlu0 %766
    %v769 = vadd.f32 %v759, %v767
    %v770 = vtanh.pop %v769
    %772 = vrot.lane.b32.xlu0 %v770, 64
    %v773 = vpop.permute.xlu0 %772
    %v775 = vmul.f32 %v757, %v773
    %v776 = vpack.c.bf16 %v775, %v775
    %v777 = vld [vmem:[%s4] sm:$0xf]
    %v778 = vld [vmem:[%s4 + $0x4] sm:$0xf]
    %v779 = vld [vmem:[%s4 + $0x8] sm:$0xf]
    %v780 = vld [vmem:[%s4 + $0xc] sm:$0xf]
    %v781 = vld [vmem:[%s5] sm:$0x1]
    %v783 = vlaneseq
    %v784 = vshrl.u32 %v783, 7
    %v785 = vsub.s32 0, %v784
    %v786 = vrot.slane %v781, %v785
    %789 = vrot.lane.b32.xlu0 %v776, 32
    %v790 = vpop.permute.xlu0 %789
    %v795 = vunpack.c.l.b16 %v777
    %v796 = vunpack.c.l.b16 %v778
    %v797 = vunpack.c.l.b16 %v779
    %v798 = vunpack.c.l.b16 %v780
    %v799 = vpack.c.b16 %v796, %v795
    %v800 = vpack.c.b16 %v798, %v797
    %v804 = vsel %vm114, %v790, 0
    %806 = vmatprep.subr.bf16.mxu0 0
    %807 = vmatpush1.bf16.msra.mxu0 %v799
    %808 = vmatprep.subr.bf16.mxu0 0
    %809 = vmatpush1.bf16.msra.mxu0 %v800
    %810 = vmatprep.subr.bf16.mxu0 0
    %811 = vmatpush1.bf16.msra.mxu0 0
    %812 = vmatprep.subr.bf16.mxu0 0
    %813 = vmatpush1.bf16.msra.mxu0 0
    %814 = vmatprep.subr.bf16.mxu0 0
    %815 = vmatpush1.bf16.msra.mxu0 0
    %816 = vmatprep.subr.bf16.mxu0 0
    %817 = vmatpush1.bf16.msra.mxu0 0
    %818 = vmatprep.subr.bf16.mxu0 0
    %819 = vmatpush1.bf16.msra.mxu0 0
    %820 = vmatprep.subr.bf16.mxu0 0
    %821 = vmatpush1.bf16.msra.mxu0 0
    %822 = vmatprep.subr.bf16.mxu0 0
    %823 = vmatpush1.bf16.msra.mxu0 0
    %824 = vmatprep.subr.bf16.mxu0 0
    %825 = vmatpush1.bf16.msra.mxu0 0
    %826 = vmatprep.subr.bf16.mxu0 0
    %827 = vmatpush1.bf16.msra.mxu0 0
    %828 = vmatprep.subr.bf16.mxu0 0
    %829 = vmatpush1.bf16.msra.mxu0 0
    %830 = vmatprep.subr.bf16.mxu0 0
    %831 = vmatpush1.bf16.msra.mxu0 0
    %832 = vmatprep.subr.bf16.mxu0 0
    %833 = vmatpush1.bf16.msra.mxu0 0
    %834 = vmatprep.subr.bf16.mxu0 0
    %835 = vmatpush1.bf16.msra.mxu0 0
    %836 = vmatprep.subr.bf16.mxu0 0
    %837 = vmatpush1.bf16.msra.mxu0 0
    %838 = vmatprep.mubr.bf16.mxu0 0
    %839 = vmatmul.mubr.bf16.gmra.mrb[0].mxu0 %v804
    %v840 = vpop.f32.mrb[0].mxu0
    %v841 = vadd.f32 %v786, %v840
    %v842 = vpop.f32.mrb[0].mxu0
    %v843 = vpop.f32.mrb[0].mxu0
    %v844 = vpop.f32.mrb[0].mxu0
    %845 = vdwg.mxu0
    %846 = vst [vmem:[#allocation2] sm:$0xff] %v841
    // Predicated region
    $region26: #{tpu_custom_call.1} parent=1 // pred_check
      _
    $region27: #{tpu_custom_call.1} parent=1 // pred_check_branch
      %848 = sbr.rel (0) target = $region29
    $region28: #{tpu_custom_call.1} parent=1 // pred_region
      %s850 = ssub.s32 128, 128
      %851 = vsyncadd [#allocation3], %s850
      %s853 = sshll.u32 [#allocation2], 4
      %s854 = int_to_ptr.vmem [resolvable:$true] %s853
      %856 = dma.vmem_to_hbm [thread:$0]  %s854, 128, %s6, [#allocation3]
    $region29: #{tpu_custom_call.1} parent=1 // pred_fallthru
      _
    // Predicated region
    $region30: #{tpu_custom_call.1} parent=1 // pred_check
      _
    $region31: #{tpu_custom_call.1} parent=1 // pred_check_branch
      %858 = sbr.rel (0) target = $region33
    $region32: #{tpu_custom_call.1} parent=1 // pred_region
      %859 = dma.done [#allocation3], 128
    $region33: #{tpu_custom_call.1} parent=1 // pred_fallthru
      _
    %860 = vsyncpa [#allocation3], 1

</llo_original>
